<compile_context>
chip_gen: v6e
topology: v6e:2x2x1
jax: 0.10.0
libtpu: 0.0.40
codegen_flags: <defaults>
</compile_context>

<pallas_src>
import functools
import math

import jax
import jax.numpy as jnp
from jax import lax
from jax.experimental import pallas as pl
from jax.experimental.pallas import tpu as pltpu


def _label_smoothing_kernel(t_ref, p_ref, out_ref, acc_ref, *,
                            n_rows, n_vocab, pad_idx,
                            confidence, smooth, log_conf, log_smooth,
                            tb, tv, lane_w):
    i = pl.program_id(0)                       # row tile ("parallel")
    k = pl.program_id(1)                       # vocab tile (reduction axis, last)

    # Stream the block in its native dtype; upcast per tile (accumulation in f32).
    pred = p_ref[...].astype(jnp.float32)      # (tb, tv)
    t = t_ref[...]                             # (tb, 1) int32 targets

    # Global vocab column / row index of every lane: (1, tv) iota + scalar offset
    # (avoids a full (tb, tv) int32 iota per step).
    col = k * tv + lax.broadcasted_iota(jnp.int32, (1, tv), 1)   # (1, tv)
    row = i * tb + lax.broadcasted_iota(jnp.int32, (tb, 1), 0)   # (tb, 1)

    is_tgt = col == t                          # scatter_(1, target, confidence)
    dist = jnp.where(is_tgt, jnp.float32(confidence), jnp.float32(smooth))
    logd = jnp.where(is_tgt, jnp.float32(log_conf), jnp.float32(log_smooth))

    dist = jnp.where(col == pad_idx, 0.0, dist)   # dist[:, pad_idx] = 0
    dist = jnp.where(t == pad_idx, 0.0, dist)     # zero rows whose target == pad_idx

    # Mask the WHOLE term: ragged tail tiles (col >= n_vocab, row >= n_rows) hold
    # unspecified data, so selecting dist*(logd-pred) only on valid lanes keeps
    # NaN/Inf out.  Where dist == 0 the term is exactly 0 (log factors are finite
    # compile-time constants), matching KLDivLoss's 0-target convention.
    valid = (col < n_vocab) & (row < n_rows)
    term = jnp.where(valid, dist * (logd - pred), 0.0)            # (tb, tv)

    @pl.when(k == 0)
    def _():
        acc_ref[...] = jnp.zeros_like(acc_ref)

    if lane_w == tv:
        acc_ref[...] += term
    else:
        # tv is a multiple of lane_w (=128): fold lane chunks with cheap VPU adds;
        # keep the cross-lane XLU reduce + narrow store off the per-step path.
        partial = term[:, 0:lane_w]
        for c in range(1, tv // lane_w):
            partial = partial + term[:, c * lane_w:(c + 1) * lane_w]
        acc_ref[...] += partial

    @pl.when(k == pl.num_programs(1) - 1)
    def _():
        out_ref[...] = jnp.sum(acc_ref[...], axis=-1, keepdims=True)


def label_smoothing_loss(predicts, target, *, n_vocab, pad_idx, label_smoothing,
                         tb_cap=256, block_bytes_cap=4 << 20):
    """predicts: (N, n_vocab) log-probs (f32 or bf16), target: (N,) int -> scalar loss."""
    N, V = predicts.shape
    assert V == n_vocab

    confidence = 1.0 - label_smoothing
    smooth = label_smoothing / (n_vocab - 2)
    # NOTE: log terms default to 0.0 when the corresponding probability is 0;
    # this is safe only because the kernel multiplies them by dist == 0 there.
    log_conf = math.log(confidence) if confidence > 0.0 else 0.0
    log_smooth = math.log(smooth) if smooth > 0.0 else 0.0

    itemsize = int(jnp.dtype(predicts.dtype).itemsize)

    # ---- tile selection (no padded HBM copies; ragged tail tiles are masked) ----
    sub = max(8, 32 // itemsize)                 # sublane granularity per dtype
    if N <= sub:
        tb = N                                   # full row dim
    else:
        # Aim for >= 2 row programs so both v7x TensorCores get work.
        tb = min(tb_cap, max(sub, (pl.cdiv(N, 2) // sub) * sub))

    lane_cap = max(128, ((block_bytes_cap // (tb * itemsize)) // 128) * 128)
    if V <= lane_cap:
        tv = V                                   # single vocab tile (full dim ok)
    else:
        tv = lane_cap                            # multiple of 128; last tile ragged
    lane_w = 128 if (tv % 128 == 0 and tv > 128) else tv

    grid = (pl.cdiv(N, tb), pl.cdiv(V, tv))

    t = target.astype(jnp.int32).reshape(N, 1)

    kernel = functools.partial(
        _label_smoothing_kernel,
        n_rows=N, n_vocab=n_vocab, pad_idx=pad_idx,
        confidence=confidence, smooth=smooth,
        log_conf=log_conf, log_smooth=log_smooth,
        tb=tb, tv=tv, lane_w=lane_w)

    block_bytes = tb * tv * itemsize
    # double-buffered predicts + small target/out/scratch buffers + headroom;
    # capped well under v7x's 64 MiB physical VMEM.
    vmem_limit = int(min(48 << 20, max(32 << 20, 3 * block_bytes + (4 << 20))))

    cost = pl.CostEstimate(
        flops=6 * N * V,
        transcendentals=0,
        bytes_accessed=N * V * itemsize + N * 4 + N * 4)

    row_losses = pl.pallas_call(
        kernel,
        out_shape=jax.ShapeDtypeStruct((N, 1), jnp.float32),
        grid_spec=pltpu.PrefetchScalarGridSpec(
            num_scalar_prefetch=0,
            grid=grid,
            in_specs=[
                pl.BlockSpec((tb, 1), lambda i, k: (i, 0)),    # target
                pl.BlockSpec((tb, tv), lambda i, k: (i, k)),   # predicts (native dtype)
            ],
            out_specs=pl.BlockSpec((tb, 1), lambda i, k: (i, 0)),  # per-row loss
            scratch_shapes=[pltpu.VMEM((tb, lane_w), jnp.float32)],
        ),
        compiler_params=pltpu.CompilerParams(
            dimension_semantics=("parallel", "arbitrary"),
            vmem_limit_bytes=vmem_limit),
        cost_estimate=cost,
    )(t, predicts)

    # KLDivLoss(size_average=False) == sum over all elements.
    return jnp.sum(row_losses)


def label_smoothing_ref(predicts, target, *, n_vocab, pad_idx, label_smoothing):
    confidence = 1.0 - label_smoothing
    smooth = label_smoothing / (n_vocab - 2)
    p = predicts.astype(jnp.float32)
    N, V = p.shape
    dist = jnp.full((N, V), smooth, jnp.float32)
    dist = dist.at[jnp.arange(N), target].set(confidence)
    dist = dist.at[:, pad_idx].set(0.0)
    dist = jnp.where((target == pad_idx)[:, None], 0.0, dist)
    logd = jnp.log(jnp.where(dist > 0, dist, 1.0))
    return jnp.sum(jnp.where(dist > 0, dist * (logd - p), 0.0))


def _make_case(key, N, V, dtype, pad_idx):
    k1, k2 = jax.random.split(key)
    logits = jax.random.normal(k1, (N, V), jnp.float32)
    predicts = jax.nn.log_softmax(logits, axis=-1).astype(dtype)  # KLDiv expects log-probs
    target = jax.random.randint(k2, (N,), 1, V, dtype=jnp.int32)
    target = target.at[N // 3].set(pad_idx).at[N - 1].set(pad_idx)  # exercise pad rows
    return predicts, target


if __name__ == "__main__":
    PAD_IDX, SMOOTHING = 0, 0.1
    key = jax.random.PRNGKey(0)

    # (N, V, dtype, block_bytes_cap, atol) — small shapes that exercise:
    #   base case (batch=2, seq=8), ragged row+vocab tiles, native bf16 streaming,
    #   and the chunked lane-accumulation path.
    cases = [
        (2 * 8, 64, jnp.float32, 4 << 20, 1e-4),
        (50, 200, jnp.float32, 16 << 10, 1e-4),
        (48, 256, jnp.bfloat16, 4 << 20, 1e-3),
        (64, 512, jnp.float32, 4 << 20, 1e-4),
    ]

    ok = True
    for idx, (N, V, dtype, cap, atol) in enumerate(cases):
        key, sub = jax.random.split(key)
        predicts, target = _make_case(sub, N, V, dtype, PAD_IDX)
        loss = label_smoothing_loss(predicts, target, n_vocab=V, pad_idx=PAD_IDX,
                                    label_smoothing=SMOOTHING, block_bytes_cap=cap)
        loss = jax.block_until_ready(loss)
        ref = label_smoothing_ref(predicts, target, n_vocab=V, pad_idx=PAD_IDX,
                                  label_smoothing=SMOOTHING)
        assert loss.shape == ()
        if not jnp.allclose(loss, ref, atol=atol, rtol=1e-4):
            ok = False
            print(f"case {idx}: mismatch kernel={loss} ref={ref}")

    if ok:
        print("KERNEL_OK")
</pallas_src>

<mosaic_0001>
module attributes {stable_mosaic.version = 11 : i64} {
  func.func @_label_smoothing_kernel(%arg0: i32, %arg1: i32, %arg2: memref<8x1xi32, #tpu.memory_space<vmem>>, %arg3: memref<8x64xf32, #tpu.memory_space<vmem>>, %arg4: memref<8x1xf32, #tpu.memory_space<vmem>>, %arg5: memref<8x64xf32, #tpu.memory_space<vmem>>) attributes {dimension_semantics = [#tpu.dimension_semantics<parallel>, #tpu.dimension_semantics<arbitrary>], iteration_bounds = array<i64: 2, 1>, scalar_prefetch = 0 : i64, scratch_operands = 1 : i64, tpu.core_type = #tpu.core_type<tc>, window_params = [{transform_indices = @transform_0, window_bounds = array<i64: 8, 1>}, {transform_indices = @transform_1, window_bounds = array<i64: 8, 64>}, {transform_indices = @transform_2, window_bounds = array<i64: 8, 1>}]} {
    %c0 = arith.constant 0 : index
    %c0_0 = arith.constant 0 : index
    %0 = vector.load %arg3[%c0, %c0_0] : memref<8x64xf32, #tpu.memory_space<vmem>>, vector<8x64xf32>
    %c0_1 = arith.constant 0 : index
    %c0_2 = arith.constant 0 : index
    %1 = vector.load %arg2[%c0_1, %c0_2] : memref<8x1xi32, #tpu.memory_space<vmem>>, vector<8x1xi32>
    %c64_i32 = arith.constant 64 : i32
    %2 = arith.muli %arg1, %c64_i32 : i32
    %3 = tpu.iota {dimensions = array<i32: 1>} : vector<1x64xi32>
    %4 = vector.broadcast %2 : i32 to vector<1x64xi32>
    %5 = arith.addi %4, %3 : vector<1x64xi32>
    %c8_i32 = arith.constant 8 : i32
    %6 = arith.muli %arg0, %c8_i32 : i32
    %7 = tpu.iota {dimensions = array<i32: 0>} : vector<8x1xi32>
    %8 = vector.broadcast %6 : i32 to vector<8x1xi32>
    %9 = arith.addi %8, %7 : vector<8x1xi32>
    %10 = vector.broadcast %5 : vector<1x64xi32> to vector<8x64xi32>
    %11 = vector.broadcast %1 : vector<8x1xi32> to vector<8x64xi32>
    %12 = arith.cmpi eq, %10, %11 : vector<8x64xi32>
    %cst = arith.constant 0.899999976 : f32
    %cst_3 = arith.constant 0.0016129032 : f32
    %13 = vector.broadcast %cst : f32 to vector<8x64xf32>
    %14 = vector.broadcast %cst_3 : f32 to vector<8x64xf32>
    %15 = arith.select %12, %13, %14 : vector<8x64xi1>, vector<8x64xf32>
    %cst_4 = arith.constant -0.105360515 : f32
    %cst_5 = arith.constant -6.42971945 : f32
    %16 = vector.broadcast %cst_4 : f32 to vector<8x64xf32>
    %17 = vector.broadcast %cst_5 : f32 to vector<8x64xf32>
    %18 = arith.select %12, %16, %17 : vector<8x64xi1>, vector<8x64xf32>
    %c0_i32 = arith.constant 0 : i32
    %19 = vector.broadcast %c0_i32 : i32 to vector<1x64xi32>
    %20 = arith.cmpi eq, %5, %19 : vector<1x64xi32>
    %cst_6 = arith.constant 0.000000e+00 : f32
    %21 = vector.shape_cast %20 : vector<1x64xi1> to vector<1x64xi1>
    %22 = vector.broadcast %21 : vector<1x64xi1> to vector<8x64xi1>
    %23 = vector.broadcast %cst_6 : f32 to vector<8x64xf32>
    %24 = arith.select %22, %23, %15 : vector<8x64xi1>, vector<8x64xf32>
    %c0_i32_7 = arith.constant 0 : i32
    %25 = vector.broadcast %c0_i32_7 : i32 to vector<8x1xi32>
    %26 = arith.cmpi eq, %1, %25 : vector<8x1xi32>
    %cst_8 = arith.constant 0.000000e+00 : f32
    %27 = vector.shape_cast %26 : vector<8x1xi1> to vector<8x1xi1>
    %28 = vector.broadcast %27 : vector<8x1xi1> to vector<8x64xi1>
    %29 = vector.broadcast %cst_8 : f32 to vector<8x64xf32>
    %30 = arith.select %28, %29, %24 : vector<8x64xi1>, vector<8x64xf32>
    %c64_i32_9 = arith.constant 64 : i32
    %31 = vector.broadcast %c64_i32_9 : i32 to vector<1x64xi32>
    %32 = arith.cmpi slt, %5, %31 : vector<1x64xi32>
    %c16_i32 = arith.constant 16 : i32
    %33 = vector.broadcast %c16_i32 : i32 to vector<8x1xi32>
    %34 = arith.cmpi slt, %9, %33 : vector<8x1xi32>
    %35 = vector.broadcast %32 : vector<1x64xi1> to vector<8x64xi1>
    %36 = vector.broadcast %34 : vector<8x1xi1> to vector<8x64xi1>
    %37 = arith.andi %35, %36 : vector<8x64xi1>
    %38 = arith.subf %18, %0 : vector<8x64xf32>
    %39 = arith.mulf %30, %38 : vector<8x64xf32>
    %cst_10 = arith.constant 0.000000e+00 : f32
    %40 = vector.broadcast %cst_10 : f32 to vector<8x64xf32>
    %41 = arith.select %37, %39, %40 : vector<8x64xi1>, vector<8x64xf32>
    %c0_i32_11 = arith.constant 0 : i32
    %42 = arith.cmpi eq, %arg1, %c0_i32_11 : i32
    %43 = arith.extui %42 : i1 to i32
    %c0_i32_12 = arith.constant 0 : i32
    %44 = arith.cmpi ne, %43, %c0_i32_12 : i32
    scf.if %44 {
      %cst_19 = arith.constant 0.000000e+00 : f32
      %51 = vector.broadcast %cst_19 : f32 to vector<8x64xf32>
      %c0_20 = arith.constant 0 : index
      %c0_21 = arith.constant 0 : index
      %52 = vector.load %arg5[%c0_20, %c0_21] : memref<8x64xf32, #tpu.memory_space<vmem>>, vector<8x64xf32>
      tpu.vector_store %arg5[%c0_20, %c0_21], %51 {strides = array<i32>} : memref<8x64xf32, #tpu.memory_space<vmem>>, vector<8x64xf32>,
    } else {
    }
    %c0_13 = arith.constant 0 : index
    %c0_14 = arith.constant 0 : index
    %45 = vector.load %arg5[%c0_13, %c0_14] : memref<8x64xf32, #tpu.memory_space<vmem>>, vector<8x64xf32>
    %46 = arith.addf %45, %41 : vector<8x64xf32>
    %c0_15 = arith.constant 0 : index
    %c0_16 = arith.constant 0 : index
    %47 = vector.load %arg5[%c0_15, %c0_16] : memref<8x64xf32, #tpu.memory_space<vmem>>, vector<8x64xf32>
    tpu.vector_store %arg5[%c0_15, %c0_16], %46 {strides = array<i32>} : memref<8x64xf32, #tpu.memory_space<vmem>>, vector<8x64xf32>,
    %c0_i32_17 = arith.constant 0 : i32
    %48 = arith.cmpi eq, %arg1, %c0_i32_17 : i32
    %49 = arith.extui %48 : i1 to i32
    %c0_i32_18 = arith.constant 0 : i32
    %50 = arith.cmpi ne, %49, %c0_i32_18 : i32
    scf.if %50 {
      %c0_19 = arith.constant 0 : index
      %c0_20 = arith.constant 0 : index
      %51 = vector.load %arg5[%c0_19, %c0_20] : memref<8x64xf32, #tpu.memory_space<vmem>>, vector<8x64xf32>
      %cst_21 = arith.constant dense<0.000000e+00> : vector<8xf32>
      %52 = vector.multi_reduction <add>, %51, %cst_21 [1] : vector<8x64xf32> to vector<8xf32>
      %53 = vector.shape_cast %52 : vector<8xf32> to vector<8x1xf32>
      %c0_22 = arith.constant 0 : index
      %c0_23 = arith.constant 0 : index
      %54 = vector.load %arg4[%c0_22, %c0_23] : memref<8x1xf32, #tpu.memory_space<vmem>>, vector<8x1xf32>
      tpu.vector_store %arg4[%c0_22, %c0_23], %53 {strides = array<i32>} : memref<8x1xf32, #tpu.memory_space<vmem>>, vector<8x1xf32>,
    } else {
    }
    return
  }
  func.func @transform_0(%arg0: i32, %arg1: i32) -> (i32, i32) {
    %c0_i32 = arith.constant 0 : i32
    %c0_i32_0 = arith.constant 0 : i32
    return %arg0, %c0_i32 : i32, i32
  }
  func.func @transform_1(%arg0: i32, %arg1: i32) -> (i32, i32) {
    %c0_i32 = arith.constant 0 : i32
    return %arg0, %arg1 : i32, i32
  }
  func.func @transform_2(%arg0: i32, %arg1: i32) -> (i32, i32) {
    %c0_i32 = arith.constant 0 : i32
    %c0_i32_0 = arith.constant 0 : i32
    return %arg0, %c0_i32 : i32, i32
  }
}

</mosaic_0001>

<llo_original>
// kernel: tpu_custom_call.1
$region0: #{tpu_custom_call.1}
  #allocation0 [shape = 'u32[]', space=smem, size = 0x4, offset = 0x4, fixed_abs, tag = 'smem constant byte address 0x4 - core index']
  #allocation1 [shape = 'u32[144,128]{1,0:T(1,128)}', space=vmem, size = 0x12000, scoped, tag = 'internal scratch']
  #allocation2 [shape = 'f32[8,64]{1,0:T(8,128)}', space=vmem, size = 0x1000, scoped, tag = 'scratch operand']
  %s0 = inlined_call_operand.vmem [shape: s32[16,1], index: 0, kind: input, shape index: {}]
  %s1 = inlined_call_operand.vmem [shape: f32[16,64], index: 1, kind: input, shape index: {}]
  %s2 = inlined_call_operand.vmem [shape: f32[16,1], index: 2, kind: output, shape index: {}]
  %s3 = sld [smem:[#allocation0]]
  $region49: #{tpu_custom_call.1} parent=0
    _
  %s5 = ssub.s32 1, %s3
  %s6 = scalar_select 0, %s5, %s3
  loop: start=0, step=1, limit=4
  $region2: #{tpu_custom_call.1} parent=0 // loop_pre_header
    _
  $region3: #{tpu_custom_call.1} parent=0 // loop_header
    %s8 = sphi 0, %s12
    %p9 = scmp.ge.s32.totalorder %s8, 4
    %s15 = sphi 0, %s27
    %s16 = sphi 0, %s23
    %s17 = sphi 0, %s15
    %s18 = sphi 0, %s16
    %s19 = sphi 0, %s17
    %s20 = sphi 0, %s18
    %s30 = sphi 0, %s32
    %s33 = sphi 0, %s30
    %s34 = sphi 0, %s33
    %s50 = sphi 0, %s34
    %s58 = sphi 0, %s60
    %s61 = sphi 0, %s58
    %s62 = sphi 0, %s61
    %s78 = sphi 0, %s62
    %s84 = sphi 0, %s86
    %s87 = sphi 0, %s84
    %s88 = sphi 0, %s87
    %s104 = sphi 0, %s88
  $region4: #{tpu_custom_call.1} parent=0 // loop_header_branch
    %11 = sbr.rel (%p9) target = $region8
  $region5: #{tpu_custom_call.1} parent=0 // loop_body
    %s13 = ssub.s32 %s8, 1
    %s14 = ssub.s32 %s8, 2
    %s21 = sadd.s32 1, %s16
    %p22 = scmp.ge.s32.totalorder %s21, 1
    %s23 = scalar_select %p22, 0, %s21
    %s24 = sadd.s32 1, %s15
    %s25 = scalar_select %p22, %s24, %s15
    %p26 = scmp.ge.s32.totalorder %s25, 2
    %s27 = scalar_select %p26, 0, %s25
    %s28 = ssub.s32 %s15, %s27
    %p29 = scmp.eq.s32.totalorder %s28, 0
    %s31 = sadd.s32 %s30, 1
    %s32 = scalar_select %p29, %s30, %s31
    %p35 = pneg %p29
    %p36 = scmp.eq.s32.totalorder %s8, 1
    %p37 = por %p35, %p36
    %p38 = scmp.ne.s32.totalorder %s30, %s33
    %p39 = scmp.eq.s32.totalorder %s8, 0
    %p40 = por %p38, %p39
    %p41 = scmp.ne.s32.totalorder %s30, %s33
    %p42 = scmp.eq.s32.totalorder %s13, 1
    %p43 = por %p41, %p42
    %p44 = scmp.ne.s32.totalorder %s33, %s34
    %p45 = scmp.eq.s32.totalorder %s13, 0
    %p46 = por %p44, %p45
    %p47 = scmp.ne.s32.totalorder %s33, %s34
    %p48 = scmp.eq.s32.totalorder %s14, 1
    %p49 = por %p47, %p48
    %p51 = scmp.ne.s32.totalorder %s34, %s50
    %p52 = scmp.eq.s32.totalorder %s14, 0
    %p53 = por %p51, %p52
    %s54 = ssub.s32 %s15, %s27
    %s55 = ssub.s32 %s16, %s23
    %s56 = sor.u32 %s54, %s55
    %p57 = scmp.eq.s32.totalorder %s56, 0
    %s59 = sadd.s32 %s58, 1
    %s60 = scalar_select %p57, %s58, %s59
    %p63 = pneg %p57
    %p64 = scmp.eq.s32.totalorder %s8, 1
    %p65 = por %p63, %p64
    %p66 = scmp.ne.s32.totalorder %s58, %s61
    %p67 = scmp.eq.s32.totalorder %s8, 0
    %p68 = por %p66, %p67
    %p69 = scmp.ne.s32.totalorder %s58, %s61
    %p70 = scmp.eq.s32.totalorder %s13, 1
    %p71 = por %p69, %p70
    %p72 = scmp.ne.s32.totalorder %s61, %s62
    %p73 = scmp.eq.s32.totalorder %s13, 0
    %p74 = por %p72, %p73
    %p75 = scmp.ne.s32.totalorder %s61, %s62
    %p76 = scmp.eq.s32.totalorder %s14, 1
    %p77 = por %p75, %p76
    %p79 = scmp.ne.s32.totalorder %s62, %s78
    %p80 = scmp.eq.s32.totalorder %s14, 0
    %p81 = por %p79, %p80
    %s82 = ssub.s32 %s15, %s27
    %p83 = scmp.eq.s32.totalorder %s82, 0
    %s85 = sadd.s32 %s84, 1
    %s86 = scalar_select %p83, %s84, %s85
    %p89 = pneg %p83
    %p90 = scmp.eq.s32.totalorder %s8, 1
    %p91 = por %p89, %p90
    %p92 = scmp.ne.s32.totalorder %s84, %s87
    %p93 = scmp.eq.s32.totalorder %s8, 0
    %p94 = por %p92, %p93
    %p95 = scmp.ne.s32.totalorder %s84, %s87
    %p96 = scmp.eq.s32.totalorder %s13, 1
    %p97 = por %p95, %p96
    %p98 = scmp.ne.s32.totalorder %s87, %s88
    %p99 = scmp.eq.s32.totalorder %s13, 0
    %p100 = por %p98, %p99
    %p101 = scmp.ne.s32.totalorder %s87, %s88
    %p102 = scmp.eq.s32.totalorder %s14, 1
    %p103 = por %p101, %p102
    %p105 = scmp.ne.s32.totalorder %s88, %s104
    %p106 = scmp.eq.s32.totalorder %s14, 0
    %p107 = por %p105, %p106
    %p108 = scmp.le.s32.totalorder 1, %s8
    %p109 = scmp.lt.s32.totalorder %s8, 3
    %p110 = pnand %p108, %p109
    %p111 = pneg %p110
    // Predicated region
    $region9: #{tpu_custom_call.1} parent=5 // pred_check
      _
    $region10: #{tpu_custom_call.1} parent=5 // pred_check_branch
      %113 = sbr.rel (%p110) target = $region12
    $region11: #{tpu_custom_call.1} parent=5 // pred_region
      %s114 = ssub.s32 %s8, 1
    $region12: #{tpu_custom_call.1} parent=5 // pred_fallthru
      _
    %p115 = scmp.lt.s32.totalorder %s8, 2
    // Predicated region
    $region13: #{tpu_custom_call.1} parent=5 // pred_check
      %p116 = pneg %p115
    $region14: #{tpu_custom_call.1} parent=5 // pred_check_branch
      %118 = sbr.rel (%p116) target = $region16
    $region15: #{tpu_custom_call.1} parent=5 // pred_region
      // Predicated region
      $region17: #{tpu_custom_call.1} parent=15 // pred_check
        %p119 = pneg %p40
      $region18: #{tpu_custom_call.1} parent=15 // pred_check_branch
        %121 = sbr.rel (%p119) target = $region20
      $region19: #{tpu_custom_call.1} parent=15 // pred_region
        %p122 = scmp.lt.s32.totalorder %s15, 1
        %s123 = scalar_select %p122, %s15, 1
        %s124 = smul.addr %s123, 8
        %s125 = scalar_lea.vmem %s0, %s124
      $region20: #{tpu_custom_call.1} parent=15 // pred_fallthru
        _
      // Predicated region
      $region21: #{tpu_custom_call.1} parent=15 // pred_check
        %p126 = pneg %p68
      $region22: #{tpu_custom_call.1} parent=15 // pred_check_branch
        %128 = sbr.rel (%p126) target = $region24
      $region23: #{tpu_custom_call.1} parent=15 // pred_region
        %p129 = scmp.lt.s32.totalorder %s15, 1
        %s130 = scalar_select %p129, %s15, 1
        %p131 = scmp.lt.s32.totalorder %s16, 0
        %s132 = scalar_select %p131, %s16, 0
        %s133 = sadd.s32 %s132, %s130
        %s134 = smul.addr %s133, 8
        %s135 = scalar_lea.vmem %s1, %s134
      $region24: #{tpu_custom_call.1} parent=15 // pred_fallthru
        _
    $region16: #{tpu_custom_call.1} parent=5 // pred_fallthru
      _
    %p136 = scmp.le.s32.totalorder 1, %s8
    %p137 = scmp.lt.s32.totalorder %s8, 3
    %p138 = pnand %p136, %p137
    %p139 = pneg %p138
    // Predicated region
    $region25: #{tpu_custom_call.1} parent=5 // pred_check
      _
    $region26: #{tpu_custom_call.1} parent=5 // pred_check_branch
      %141 = sbr.rel (%p138) target = $region28
    $region27: #{tpu_custom_call.1} parent=5 // pred_region
      %s142 = ssub.s32 %s8, 1
      %p143 = scmp.lt.s32.totalorder %s17, 1
      %s144 = scalar_select %p143, %s17, 1
      %s145 = smul.addr %s144, 8
      %s146 = scalar_lea.vmem %s0, %s145
      %p147 = pneg %p46
      %p148 = pneg %p43
      %p149 = scmp.lt.s32.totalorder %s17, 1
      %s150 = scalar_select %p149, %s17, 1
      %p151 = scmp.lt.s32.totalorder %s18, 0
      %s152 = scalar_select %p151, %s18, 0
      %s153 = sadd.s32 %s152, %s150
      %s154 = smul.addr %s153, 8
      %s155 = scalar_lea.vmem %s1, %s154
      %p156 = pneg %p74
      %p157 = pneg %p71
      %p158 = pneg %p100
      %p159 = pneg %p97
      %p160 = scmp.lt.s32.totalorder %s17, 1
      %s161 = scalar_select %p160, %s17, 1
      %s162 = smul.addr %s161, 8
      %s163 = scalar_lea.vmem %s2, %s162
      %p164 = scmp.lt.s32.totalorder %s17, 1
      %s165 = scalar_select %p164, %s17, 1
      %s166 = smul.addr %s165, 8
      %s167 = scalar_lea.vmem %s0, %s166
      %p168 = scmp.lt.s32.totalorder %s17, 1
      %s169 = scalar_select %p168, %s17, 1
      %p170 = scmp.lt.s32.totalorder %s18, 0
      %s171 = scalar_select %p170, %s18, 0
      %s172 = sadd.s32 %s171, %s169
      %s173 = smul.addr %s172, 8
      %s174 = scalar_lea.vmem %s1, %s173
      %p175 = scmp.lt.s32.totalorder %s17, 1
      %s176 = scalar_select %p175, %s17, 1
      %s177 = smul.addr %s176, 8
      %s178 = scalar_lea.vmem %s2, %s177
      %v179 = vld [vmem:[%s174] sm:$0xff]
      %v180 = vld [vmem:[%s167] sm:$0xff]
      %s181 = smul.u32 %s18, 64
      %v182 = vlaneseq
      %v183 = vand.u32 %v182, 127
      %v184 = vstv %s181
      %v185 = vadd.s32 %v184, %v183
      %s186 = smul.u32 %s17, 8
      %v187 = vlaneseq
      %v188 = vshrl.u32 %v187, 7
      %v189 = vstv %s186
      %v190 = vadd.s32 %v189, %v188
      %191 = vset.pattern.permute.xlu0 0
      %192 = vperm.xlu0 %191, %v180
      %v193 = vpop.permute.xlu0 %192
      %vm194 = vcmp.eq.s32.totalorder %v185, %v193
      %v195 = vsel %vm194, 0.9, 0.0016129032
      %v196 = vsel %vm194, -0.105360515, -6.4297194
      %vm197 = vcmp.eq.s32.totalorder %v185, 0
      %v198 = vsel %vm197, 1, 0
      %vm199 = vcmp.eq.s32.totalorder %v198, 1
      %v200 = vsel %vm199, 0.0, %v195
      %vm201 = vcmp.eq.s32.totalorder %v180, 0
      %v202 = vsel %vm201, 1, 0
      %203 = vset.pattern.permute.xlu0 0
      %204 = vperm.xlu0 %203, %v202
      %v205 = vpop.permute.xlu0 %204
      %vm206 = vcmp.eq.s32.totalorder %v205, 1
      %v207 = vsel %vm206, 0.0, %v200
      %vm208 = vcmp.lt.s32.totalorder %v185, 64
      %vm209 = vcmp.lt.s32.totalorder %v190, 16
      %v210 = vsel %vm208, 1, 0
      %vm211 = vcmp.eq.s32.totalorder %v210, 1
      %v212 = vsel %vm209, 1, 0
      %vm213 = vcmp.eq.s32.totalorder %v212, 1
      %vm214 = vmand %vm211, %vm213
      %v215 = vsub.f32 %v196, %v179
      %v216 = vmul.f32 %v207, %v215
      %v217 = vsel %vm214, %v216, 0.0
      %p218 = scmp.eq.s32.totalorder %s18, 0
      // Predicated region
      $region29: #{tpu_custom_call.1} parent=27 // pred_check
        %p219 = pneg %p218
      $region30: #{tpu_custom_call.1} parent=27 // pred_check_branch
        %221 = sbr.rel (%p219) target = $region32
      $region31: #{tpu_custom_call.1} parent=27 // pred_region
        %vm222 = vcmask 523264
        %223 = vst.msk [vmem:[#allocation2] sm:$0xff] %vm222, 0.0
      $region32: #{tpu_custom_call.1} parent=27 // pred_fallthru
        _
      %v224 = vld [vmem:[#allocation2] sm:$0xff]
      %v225 = vadd.f32 %v224, %v217
      %vm226 = vcmask 523264
      %227 = vst.msk [vmem:[#allocation2] sm:$0xff] %vm226, %v225
      // Predicated region
      $region33: #{tpu_custom_call.1} parent=27 // pred_check
        %p228 = pneg %p218
      $region34: #{tpu_custom_call.1} parent=27 // pred_check_branch
        %230 = sbr.rel (%p228) target = $region36
      $region35: #{tpu_custom_call.1} parent=27 // pred_region
        %v231 = vld [vmem:[#allocation2] sm:$0xff]
        %v232 = vsel %vm226, %v231, 0.0
        %233 = vadd.xlane.f32.xlu0 %v232
        %v234 = vpop.xlane.xlu0 %233
        %vm235 = vcmask 7168
        %236 = vst.msk [vmem:[%s178] sm:$0xff] %vm235, %v234
      $region36: #{tpu_custom_call.1} parent=27 // pred_fallthru
        _
      %p237 = scmp.lt.s32.totalorder %s17, 1
      %s238 = scalar_select %p237, %s17, 1
      %s239 = smul.addr %s238, 8
      %s240 = scalar_lea.vmem %s2, %s239
      // Predicated region
      $region37: #{tpu_custom_call.1} parent=27 // pred_check
        %p241 = pneg %p97
      $region38: #{tpu_custom_call.1} parent=27 // pred_check_branch
        %243 = sbr.rel (%p241) target = $region40
      $region39: #{tpu_custom_call.1} parent=27 // pred_region
        _
      $region40: #{tpu_custom_call.1} parent=27 // pred_fallthru
        _
    $region28: #{tpu_custom_call.1} parent=5 // pred_fallthru
      _
    %p244 = scmp.le.s32.totalorder 2, %s8
    // Predicated region
    $region41: #{tpu_custom_call.1} parent=5 // pred_check
      %p245 = pneg %p244
    $region42: #{tpu_custom_call.1} parent=5 // pred_check_branch
      %247 = sbr.rel (%p245) target = $region44
    $region43: #{tpu_custom_call.1} parent=5 // pred_region
      %s248 = ssub.s32 %s8, 2
      // Predicated region
      $region45: #{tpu_custom_call.1} parent=43 // pred_check
        %p249 = pneg %p103
      $region46: #{tpu_custom_call.1} parent=43 // pred_check_branch
        %251 = sbr.rel (%p249) target = $region48
      $region47: #{tpu_custom_call.1} parent=43 // pred_region
        %p252 = scmp.lt.s32.totalorder %s19, 1
        %s253 = scalar_select %p252, %s19, 1
        %s254 = smul.addr %s253, 8
        %s255 = scalar_lea.vmem %s2, %s254
      $region48: #{tpu_custom_call.1} parent=43 // pred_fallthru
        _
    $region44: #{tpu_custom_call.1} parent=5 // pred_fallthru
      _
  $region6: #{tpu_custom_call.1} parent=0 // loop_footer
    %s12 = sadd.s32 1, %s8
  $region7: #{tpu_custom_call.1} parent=0 // loop_footer_branch
    %7 = sbr.rel target = $region3
  $region8: #{tpu_custom_call.1} parent=0 // loop_exit
    _

</llo_original>
